<compile_context>
chip_gen: v7x
topology: tpu7x:2x2x1
jax: 0.10.0
libtpu: 0.0.40
codegen_flags: <defaults>
</compile_context>

<pallas_src>
import jax
import jax.numpy as jnp
from jax.experimental import pallas as pl
from jax.experimental.pallas import tpu as pltpu


def _round_up(n: int, m: int) -> int:
    return ((n + m - 1) // m) * m


# ----------------------------------------------------------------------------
# Pallas kernel: one SAGEConv layer + ReLU + BatchNorm (eval affine); source
# axis tiled as a reduction into a VMEM f32 accumulator.
# ----------------------------------------------------------------------------
def sage_bn_kernel(a_ref, x_ref, xt_ref, invdeg_ref, w_ref, affine_ref,
                   o_ref, acc_ref):
    # a_ref      : (tile_t, tile_s)       bf16 0/1 (multiplicity) adjacency tile
    # x_ref      : (tile_s, Cin_pad)      bf16 source-node feature tile
    # xt_ref     : (tile_t, Cin_pad)      bf16 target-node ("root") feature tile
    # invdeg_ref : (tile_t, 1)            f32  1 / in-degree
    # w_ref      : (2, Cin_pad, H_pad)    bf16 [W_l, W_r] stacked (x @ W layout)
    # affine_ref : (8, H_pad)             f32  row0=bias, row1=BN scale, row2=BN shift
    # acc_ref    : (tile_t, Cin_pad)      f32  VMEM accumulator for A @ x
    k = pl.program_id(1)

    @pl.when(k == 0)
    def _():
        acc_ref[...] = jnp.zeros_like(acc_ref)

    # Partial aggregation over this source tile: bf16 x bf16 -> f32 on the MXU.
    acc_ref[...] += jnp.dot(a_ref[...], x_ref[...],
                            preferred_element_type=jnp.float32)

    @pl.when(k == pl.num_programs(1) - 1)
    def _():
        # Exact mean normalization (A stayed 0/1, 1/deg applied here in f32).
        agg = acc_ref[...] * invdeg_ref[...]
        out = (
            jnp.dot(agg.astype(jnp.bfloat16), w_ref[0],
                    preferred_element_type=jnp.float32)
            + jnp.dot(xt_ref[...], w_ref[1],
                      preferred_element_type=jnp.float32)
            + affine_ref[0:1, :]
        )
        out = jnp.maximum(out, 0.0)                                # ReLU
        out = out * affine_ref[1:2, :] + affine_ref[2:3, :]        # BN (eval)
        o_ref[...] = out.astype(o_ref.dtype)                       # bf16 store


def sage_conv_bn_pallas(A_p, x_p, invdeg_p, W2_p, affine_p,
                        *, tile_t, tile_s, vmem_limit_bytes):
    """One fused SAGEConv + ReLU + BN layer on pre-padded operands.

    A_p      : (T_pad, S_pad)          bf16 unnormalized adjacency
    x_p      : (S_pad, Cin_pad)        bf16 source features (targets = rows < T)
    invdeg_p : (T_pad, 1)              f32
    W2_p     : (2, Cin_pad, H_pad)     bf16 stacked [W_l, W_r]
    affine_p : (8, H_pad)              f32  bias / BN scale / BN shift
    Returns (T_pad, H_pad) bf16.
    """
    T_pad, S_pad = A_p.shape
    Cin_pad = x_p.shape[1]
    H_pad = W2_p.shape[2]
    grid = (T_pad // tile_t, S_pad // tile_s)

    return pl.pallas_call(
        sage_bn_kernel,
        out_shape=jax.ShapeDtypeStruct((T_pad, H_pad), jnp.bfloat16),
        grid=grid,
        in_specs=[
            pl.BlockSpec((tile_t, tile_s), lambda i, k: (i, k)),      # A tile
            pl.BlockSpec((tile_s, Cin_pad), lambda i, k: (k, 0)),     # x source
            pl.BlockSpec((tile_t, Cin_pad), lambda i, k: (i, 0)),     # x target
            pl.BlockSpec((tile_t, 1), lambda i, k: (i, 0)),           # 1/deg
            pl.BlockSpec((2, Cin_pad, H_pad), lambda i, k: (0, 0, 0)),  # [W_l,W_r]
            pl.BlockSpec((8, H_pad), lambda i, k: (0, 0)),            # bias/scale/shift
        ],
        out_specs=pl.BlockSpec((tile_t, H_pad), lambda i, k: (i, 0)),
        scratch_shapes=[pltpu.VMEM((tile_t, Cin_pad), jnp.float32)],
        compiler_params=pltpu.CompilerParams(
            dimension_semantics=("parallel", "arbitrary"),
            vmem_limit_bytes=vmem_limit_bytes),
    )(A_p, x_p, x_p, invdeg_p, W2_p, affine_p)


# ----------------------------------------------------------------------------
# Tile selection: big tiles (tile_s >= 512) to amortize per-step overhead,
# tile_t = 256 for v6e/v7x MXU when enough rows exist (keeps >= 2 grid rows
# for megacore), explicit VMEM budget so the combo also fits v7x (64 MiB).
# ----------------------------------------------------------------------------
def _pick_tiles(num_tgt, num_src, cin_pad, h_pad,
                *, tile_s_max=512, vmem_budget=48 << 20):
    t128 = _round_up(max(num_tgt, 1), 128) // 128
    tile_t = 256 if t128 >= 4 else 128
    T_pad = _round_up(max(num_tgt, 1), tile_t)
    s_need = max(num_src, T_pad)
    tile_s = min(tile_s_max, _round_up(s_need, 256))

    def est(tt, ts):
        in_bytes = 2 * (tt * ts * 2 + ts * cin_pad * 2 + tt * cin_pad * 2
                        + tt * 4 + 2 * cin_pad * h_pad * 2 + 8 * h_pad * 4)
        out_bytes = 2 * tt * h_pad * 2
        acc_bytes = tt * cin_pad * 4
        return in_bytes + out_bytes + acc_bytes

    while tile_s > 256 and est(tile_t, tile_s) > vmem_budget:
        tile_s //= 2
    S_pad = _round_up(s_need, tile_s)
    vmem_limit = int(min(64 << 20, max(2 * est(tile_t, tile_s), 32 << 20)))
    return tile_t, tile_s, T_pad, S_pad, vmem_limit


def _fit_rows(x_p, rows_pad):
    """Pad/slice a padded feature array to exactly rows_pad rows."""
    r = x_p.shape[0]
    if r == rows_pad:
        return x_p
    if r > rows_pad:
        return x_p[:rows_pad]
    return jnp.concatenate(
        [x_p, jnp.zeros((rows_pad - r, x_p.shape[1]), x_p.dtype)], axis=0)


def build_adjacency_and_invdeg_padded(edge_index, T_pad, S_pad):
    """Scatter edges directly into the padded buffer; cast to bf16 exactly once."""
    src = edge_index[0]
    dst = edge_index[1]
    A = jnp.zeros((T_pad, S_pad), jnp.float32).at[dst, src].add(1.0)
    deg = A.sum(axis=1, keepdims=True)
    inv_deg = 1.0 / jnp.maximum(deg, 1.0)   # zero-in-degree targets aggregate to 0
    return A.astype(jnp.bfloat16), inv_deg


# ----------------------------------------------------------------------------
# SageForDiffPool parameters + forward over the sampled `adjs` list.
# ----------------------------------------------------------------------------
def init_sage_diffpool_params(key, in_channels, hidden_channels, out_channels,
                              num_layers):
    params = []
    for i in range(num_layers):
        cin = in_channels if i == 0 else hidden_channels
        cout = out_channels if i == num_layers - 1 else hidden_channels
        key, k1, k2, k3, k4 = jax.random.split(key, 5)
        s = 1.0 / jnp.sqrt(jnp.float32(cin))
        W_l = jax.random.uniform(k1, (cin, cout), jnp.float32, -s, s)
        W_r = jax.random.uniform(k2, (cin, cout), jnp.float32, -s, s)
        b = jnp.zeros((1, cout), jnp.float32)
        gamma = 1.0 + 0.1 * jax.random.normal(k3, (1, cout), jnp.float32)
        beta = 0.1 * jax.random.normal(k4, (1, cout), jnp.float32)
        running_mean = jnp.zeros((1, cout), jnp.float32)
        running_var = jnp.ones((1, cout), jnp.float32)
        params.append(dict(W_l=W_l, W_r=W_r, b=b, gamma=gamma, beta=beta,
                           mean=running_mean, var=running_var))
    return params


def sage_for_diffpool_forward(params, x, adjs, *, eps=1e-5, tile_s_max=512):
    """Mirrors SageForDiffPool.forward(x, adjs).

    adjs: list of (edge_index, e_id, size) per layer, size = (num_src, num_tgt).
    Returns (num_tgt_last, out_channels) f32.
    """
    x_p = None           # padded bf16 features carried between layers
    num_tgt = x.shape[0]
    H = x.shape[1]
    for i, (edge_index, _e_id, size) in enumerate(adjs):
        num_src, num_tgt = size
        p = params[i]
        Cin, H = p["W_l"].shape
        Cin_pad = _round_up(Cin, 128)
        H_pad = _round_up(H, 128)

        tile_t, tile_s, T_pad, S_pad, vmem_limit = _pick_tiles(
            num_tgt, num_src, Cin_pad, H_pad, tile_s_max=tile_s_max)

        A_p, invdeg_p = build_adjacency_and_invdeg_padded(edge_index, T_pad, S_pad)

        if x_p is None:
            x_p = jnp.zeros((S_pad, Cin_pad), jnp.bfloat16)
            x_p = x_p.at[:num_src, :Cin].set(x[:num_src].astype(jnp.bfloat16))
        else:
            assert x_p.shape[1] == Cin_pad, (x_p.shape, Cin_pad)
            x_p = _fit_rows(x_p, S_pad)

        # Folded BN (eval mode) + bias packed into one (8, H_pad) operand.
        bn_scale = p["gamma"] / jnp.sqrt(p["var"] + eps)
        bn_shift = p["beta"] - p["mean"] * bn_scale
        affine_p = jnp.zeros((8, H_pad), jnp.float32)
        affine_p = affine_p.at[0, :H].set(p["b"][0])
        affine_p = affine_p.at[1, :H].set(bn_scale[0])
        affine_p = affine_p.at[2, :H].set(bn_shift[0])

        # Stacked, padded weights in bf16 (resident in VMEM across the grid).
        W2_p = jnp.zeros((2, Cin_pad, H_pad), jnp.bfloat16)
        W2_p = W2_p.at[0, :Cin, :H].set(p["W_l"].astype(jnp.bfloat16))
        W2_p = W2_p.at[1, :Cin, :H].set(p["W_r"].astype(jnp.bfloat16))

        x_p = sage_conv_bn_pallas(A_p, x_p, invdeg_p, W2_p, affine_p,
                                  tile_t=tile_t, tile_s=tile_s,
                                  vmem_limit_bytes=vmem_limit)

    return x_p[:num_tgt, :H].astype(jnp.float32)


# ----------------------------------------------------------------------------
# Pure-JAX reference (mimics the kernel's bf16 operand / output rounding).
# ----------------------------------------------------------------------------
def _reference_forward(params, x, adjs, *, eps=1e-5):
    def bf(v):
        return v.astype(jnp.bfloat16).astype(jnp.float32)
    for i, (edge_index, _e, size) in enumerate(adjs):
        num_src, num_tgt = size
        src, dst = edge_index[0], edge_index[1]
        A = jnp.zeros((num_tgt, num_src), jnp.float32).at[dst, src].add(1.0)
        deg = A.sum(axis=1, keepdims=True)
        inv_deg = 1.0 / jnp.maximum(deg, 1.0)
        p = params[i]
        bn_scale = p["gamma"] / jnp.sqrt(p["var"] + eps)
        bn_shift = p["beta"] - p["mean"] * bn_scale
        xb = bf(x[:num_src])
        agg = (bf(A) @ xb) * inv_deg
        out = bf(agg) @ bf(p["W_l"]) + xb[:num_tgt] @ bf(p["W_r"]) + p["b"]
        out = jnp.maximum(out, 0.0) * bn_scale + bn_shift
        x = bf(out)          # kernel emits bf16; next layer consumes bf16
    return x


# ----------------------------------------------------------------------------
# Demo
# ----------------------------------------------------------------------------
if __name__ == "__main__":
    key = jax.random.PRNGKey(0)

    in_channels, hidden_channels, out_channels, num_layers = 32, 32, 48, 2
    n_src_l1, n_tgt_l1 = 64, 32    # layer-1 sampled bipartite graph
    n_src_l2, n_tgt_l2 = 32, 16    # layer-2 sampled bipartite graph
    n_edges_l1, n_edges_l2 = 128, 64

    key, kx, ke1s, ke1d, ke2s, ke2d, kp = jax.random.split(key, 7)

    # Node features for the layer-1 source set (largest hop neighborhood).
    x = jax.random.normal(kx, (n_src_l1, in_channels), jnp.float32)

    # Sampled edge indices: row 0 = source node id, row 1 = target node id.
    ei1 = jnp.stack([
        jax.random.randint(ke1s, (n_edges_l1,), 0, n_src_l1),
        jax.random.randint(ke1d, (n_edges_l1,), 0, n_tgt_l1),
    ]).astype(jnp.int32)
    ei2 = jnp.stack([
        jax.random.randint(ke2s, (n_edges_l2,), 0, n_src_l2),
        jax.random.randint(ke2d, (n_edges_l2,), 0, n_tgt_l2),
    ]).astype(jnp.int32)

    adjs = [
        (ei1, None, (n_src_l1, n_tgt_l1)),
        (ei2, None, (n_src_l2, n_tgt_l2)),
    ]

    params = init_sage_diffpool_params(kp, in_channels, hidden_channels,
                                       out_channels, num_layers)

    out = sage_for_diffpool_forward(params, x, adjs)
    out = jax.block_until_ready(out)
    assert out.shape == (n_tgt_l2, out_channels), out.shape

    ref = jax.block_until_ready(_reference_forward(params, x, adjs))
    assert jnp.allclose(out, ref, rtol=2e-2, atol=2e-2), (
        float(jnp.max(jnp.abs(out - ref))))

    print("KERNEL_OK")
</pallas_src>

<mosaic_0001>
module attributes {stable_mosaic.version = 11 : i64} {
  func.func @sage_bn_kernel(%arg0: i32, %arg1: i32, %arg2: memref<128x256xbf16, #tpu.memory_space<vmem>>, %arg3: memref<256x128xbf16, #tpu.memory_space<vmem>>, %arg4: memref<128x128xbf16, #tpu.memory_space<vmem>>, %arg5: memref<128x1xf32, #tpu.memory_space<vmem>>, %arg6: memref<2x128x128xbf16, #tpu.memory_space<vmem>>, %arg7: memref<8x128xf32, #tpu.memory_space<vmem>>, %arg8: memref<128x128xbf16, #tpu.memory_space<vmem>>, %arg9: memref<128x128xf32, #tpu.memory_space<vmem>>) attributes {dimension_semantics = [#tpu.dimension_semantics<parallel>, #tpu.dimension_semantics<arbitrary>], iteration_bounds = array<i64: 1, 1>, scalar_prefetch = 0 : i64, scratch_operands = 1 : i64, tpu.core_type = #tpu.core_type<tc>, window_params = [{transform_indices = @transform_0, window_bounds = array<i64: 128, 256>}, {transform_indices = @transform_1, window_bounds = array<i64: 256, 128>}, {transform_indices = @transform_2, window_bounds = array<i64: 128, 128>}, {transform_indices = @transform_3, window_bounds = array<i64: 128, 1>}, {pipeline_mode = #tpu.pipeline_mode<synchronous>, transform_indices = @transform_4, window_bounds = array<i64: 2, 128, 128>}, {pipeline_mode = #tpu.pipeline_mode<synchronous>, transform_indices = @transform_5, window_bounds = array<i64: 8, 128>}, {transform_indices = @transform_6, window_bounds = array<i64: 128, 128>}]} {
    %c0_i32 = arith.constant 0 : i32
    %0 = arith.cmpi eq, %arg1, %c0_i32 : i32
    %1 = arith.extui %0 : i1 to i32
    %c0_i32_0 = arith.constant 0 : i32
    %2 = arith.cmpi ne, %1, %c0_i32_0 : i32
    scf.if %2 {
      %cst_10 = arith.constant 0.000000e+00 : f32
      %12 = vector.broadcast %cst_10 : f32 to vector<128x128xf32>
      %c0_11 = arith.constant 0 : index
      %c0_12 = arith.constant 0 : index
      %13 = vector.load %arg9[%c0_11, %c0_12] : memref<128x128xf32, #tpu.memory_space<vmem>>, vector<128x128xf32>
      tpu.vector_store %arg9[%c0_11, %c0_12], %12 {strides = array<i32>} : memref<128x128xf32, #tpu.memory_space<vmem>>, vector<128x128xf32>,
    } else {
    }
    %c0 = arith.constant 0 : index
    %c0_1 = arith.constant 0 : index
    %3 = vector.load %arg9[%c0, %c0_1] : memref<128x128xf32, #tpu.memory_space<vmem>>, vector<128x128xf32>
    %c0_2 = arith.constant 0 : index
    %c0_3 = arith.constant 0 : index
    %4 = vector.load %arg2[%c0_2, %c0_3] : memref<128x256xbf16, #tpu.memory_space<vmem>>, vector<128x256xbf16>
    %c0_4 = arith.constant 0 : index
    %c0_5 = arith.constant 0 : index
    %5 = vector.load %arg3[%c0_4, %c0_5] : memref<256x128xbf16, #tpu.memory_space<vmem>>, vector<256x128xbf16>
    %cst = arith.constant dense<0.000000e+00> : vector<128x128xf32>
    %6 = tpu.matmul %4, %5, %cst {dimension_numbers = #tpu.dot_dimension_numbers<[1], [0], [0], [1], [0, 0, 1, 1], [], []>} : vector<128x256xbf16>, vector<256x128xbf16>, vector<128x128xf32> -> vector<128x128xf32>
    %7 = arith.addf %3, %6 : vector<128x128xf32>
    %c0_6 = arith.constant 0 : index
    %c0_7 = arith.constant 0 : index
    %8 = vector.load %arg9[%c0_6, %c0_7] : memref<128x128xf32, #tpu.memory_space<vmem>>, vector<128x128xf32>
    tpu.vector_store %arg9[%c0_6, %c0_7], %7 {strides = array<i32>} : memref<128x128xf32, #tpu.memory_space<vmem>>, vector<128x128xf32>,
    %c0_i32_8 = arith.constant 0 : i32
    %9 = arith.cmpi eq, %arg1, %c0_i32_8 : i32
    %10 = arith.extui %9 : i1 to i32
    %c0_i32_9 = arith.constant 0 : i32
    %11 = arith.cmpi ne, %10, %c0_i32_9 : i32
    scf.if %11 {
      %c0_10 = arith.constant 0 : index
      %c0_11 = arith.constant 0 : index
      %12 = vector.load %arg9[%c0_10, %c0_11] : memref<128x128xf32, #tpu.memory_space<vmem>>, vector<128x128xf32>
      %c0_12 = arith.constant 0 : index
      %c0_13 = arith.constant 0 : index
      %13 = vector.load %arg5[%c0_12, %c0_13] : memref<128x1xf32, #tpu.memory_space<vmem>>, vector<128x1xf32>
      %14 = vector.broadcast %13 : vector<128x1xf32> to vector<128x128xf32>
      %15 = arith.mulf %12, %14 : vector<128x128xf32>
      %16 = arith.truncf %15 : vector<128x128xf32> to vector<128x128xbf16>
      %c0_14 = arith.constant 0 : index
      %c0_15 = arith.constant 0 : index
      %c0_16 = arith.constant 0 : index
      %17 = vector.load %arg6[%c0_14, %c0_15, %c0_16] : memref<2x128x128xbf16, #tpu.memory_space<vmem>>, vector<1x128x128xbf16>
      %18 = vector.shape_cast %17 : vector<1x128x128xbf16> to vector<128x128xbf16>
      %cst_17 = arith.constant dense<0.000000e+00> : vector<128x128xf32>
      %19 = tpu.matmul %16, %18, %cst_17 {dimension_numbers = #tpu.dot_dimension_numbers<[1], [0], [0], [1], [0, 0, 1, 1], [], []>} : vector<128x128xbf16>, vector<128x128xbf16>, vector<128x128xf32> -> vector<128x128xf32>
      %c0_18 = arith.constant 0 : index
      %c0_19 = arith.constant 0 : index
      %20 = vector.load %arg4[%c0_18, %c0_19] : memref<128x128xbf16, #tpu.memory_space<vmem>>, vector<128x128xbf16>
      %c1 = arith.constant 1 : index
      %c0_20 = arith.constant 0 : index
      %c0_21 = arith.constant 0 : index
      %21 = vector.load %arg6[%c1, %c0_20, %c0_21] : memref<2x128x128xbf16, #tpu.memory_space<vmem>>, vector<1x128x128xbf16>
      %22 = vector.shape_cast %21 : vector<1x128x128xbf16> to vector<128x128xbf16>
      %cst_22 = arith.constant dense<0.000000e+00> : vector<128x128xf32>
      %23 = tpu.matmul %20, %22, %cst_22 {dimension_numbers = #tpu.dot_dimension_numbers<[1], [0], [0], [1], [0, 0, 1, 1], [], []>} : vector<128x128xbf16>, vector<128x128xbf16>, vector<128x128xf32> -> vector<128x128xf32>
      %24 = arith.addf %19, %23 : vector<128x128xf32>
      %c0_23 = arith.constant 0 : index
      %c0_24 = arith.constant 0 : index
      %25 = vector.load %arg7[%c0_23, %c0_24] : memref<8x128xf32, #tpu.memory_space<vmem>>, vector<1x128xf32>
      %26 = vector.broadcast %25 : vector<1x128xf32> to vector<128x128xf32>
      %27 = arith.addf %24, %26 : vector<128x128xf32>
      %cst_25 = arith.constant 0.000000e+00 : f32
      %28 = vector.broadcast %cst_25 : f32 to vector<128x128xf32>
      %29 = arith.maximumf %27, %28 : vector<128x128xf32>
      %c1_26 = arith.constant 1 : index
      %c0_27 = arith.constant 0 : index
      %30 = vector.load %arg7[%c1_26, %c0_27] : memref<8x128xf32, #tpu.memory_space<vmem>>, vector<1x128xf32>
      %31 = vector.broadcast %30 : vector<1x128xf32> to vector<128x128xf32>
      %32 = arith.mulf %29, %31 : vector<128x128xf32>
      %c2 = arith.constant 2 : index
      %c0_28 = arith.constant 0 : index
      %33 = vector.load %arg7[%c2, %c0_28] : memref<8x128xf32, #tpu.memory_space<vmem>>, vector<1x128xf32>
      %34 = vector.broadcast %33 : vector<1x128xf32> to vector<128x128xf32>
      %35 = arith.addf %32, %34 : vector<128x128xf32>
      %36 = arith.truncf %35 : vector<128x128xf32> to vector<128x128xbf16>
      %c0_29 = arith.constant 0 : index
      %c0_30 = arith.constant 0 : index
      %37 = vector.load %arg8[%c0_29, %c0_30] : memref<128x128xbf16, #tpu.memory_space<vmem>>, vector<128x128xbf16>
      tpu.vector_store %arg8[%c0_29, %c0_30], %36 {strides = array<i32>} : memref<128x128xbf16, #tpu.memory_space<vmem>>, vector<128x128xbf16>,
    } else {
    }
    return
  }
  func.func @transform_0(%arg0: i32, %arg1: i32) -> (i32, i32) {
    %c0_i32 = arith.constant 0 : i32
    return %arg0, %arg1 : i32, i32
  }
  func.func @transform_1(%arg0: i32, %arg1: i32) -> (i32, i32) {
    %c0_i32 = arith.constant 0 : i32
    %c0_i32_0 = arith.constant 0 : i32
    return %arg1, %c0_i32 : i32, i32
  }
  func.func @transform_2(%arg0: i32, %arg1: i32) -> (i32, i32) {
    %c0_i32 = arith.constant 0 : i32
    %c0_i32_0 = arith.constant 0 : i32
    return %arg0, %c0_i32 : i32, i32
  }
  func.func @transform_3(%arg0: i32, %arg1: i32) -> (i32, i32) {
    %c0_i32 = arith.constant 0 : i32
    %c0_i32_0 = arith.constant 0 : i32
    return %arg0, %c0_i32 : i32, i32
  }
  func.func @transform_4(%arg0: i32, %arg1: i32) -> (i32, i32, i32) {
    %c0_i32 = arith.constant 0 : i32
    %c0_i32_0 = arith.constant 0 : i32
    %c0_i32_1 = arith.constant 0 : i32
    %c0_i32_2 = arith.constant 0 : i32
    return %c0_i32, %c0_i32_0, %c0_i32_1 : i32, i32, i32
  }
  func.func @transform_5(%arg0: i32, %arg1: i32) -> (i32, i32) {
    %c0_i32 = arith.constant 0 : i32
    %c0_i32_0 = arith.constant 0 : i32
    %c0_i32_1 = arith.constant 0 : i32
    return %c0_i32, %c0_i32_0 : i32, i32
  }
  func.func @transform_6(%arg0: i32, %arg1: i32) -> (i32, i32) {
    %c0_i32 = arith.constant 0 : i32
    %c0_i32_0 = arith.constant 0 : i32
    return %arg0, %c0_i32 : i32, i32
  }
}

</mosaic_0001>

<llo_original>
// kernel: tpu_custom_call.1
$region0: #{tpu_custom_call.1}
  #allocation0 [shape = 'u32[]', space=smem, size = 0x4, offset = 0x4, fixed_abs, tag = 'smem constant byte address 0x4 - core index']
  #allocation1 [shape = 'u32[144,128]{1,0:T(1,128)}', space=vmem, size = 0x12000, scoped, tag = 'internal scratch']
  #allocation2 [shape = 'f32[128,128]{1,0:T(8,128)}', space=vmem, size = 0x10000, scoped, tag = 'scratch operand']
  %s0 = inlined_call_operand.vmem [shape: bf16[128,256], index: 0, kind: input, shape index: {}]
  %s1 = inlined_call_operand.hbm [shape: bf16[256,128], index: 1, kind: input, shape index: {}]
  %s2 = inlined_call_operand.hbm [shape: bf16[256,128], index: 2, kind: input, shape index: {}]
  %s3 = inlined_call_operand.vmem [shape: f32[128,1], index: 3, kind: input, shape index: {}]
  %s4 = inlined_call_operand.hbm [shape: bf16[2,128,128], index: 4, kind: input, shape index: {}]
  %s5 = inlined_call_operand.vmem [shape: f32[8,128], index: 5, kind: input, shape index: {}]
  %s6 = inlined_call_operand.hbm [shape: bf16[128,128], index: 6, kind: output, shape index: {}]
  %s7 = sld [smem:[#allocation0]]
  $region54: #{tpu_custom_call.1} parent=0
    _
  %s9 = ssub.s32 1, %s7
  %s10 = scalar_select 0, %s9, %s7
  $region1: #{tpu_custom_call.1} parent=0
    #allocation3 [shape = 'u8[65536]{0}', space=vmem, size = 0x10000, scoped, tag = 'input window, operand 1, single buffered']
    #allocation4 [shape = 's32[1]{0}', space=sflag, size = 0x4, scoped, tag = 'scoped memory for tpu_custom_call.1']
    #allocation5 [shape = 's32[1]{0}', space=sflag, size = 0x4, scoped, tag = 'scoped memory for tpu_custom_call.1']
    #allocation6 [shape = 'u8[32768]{0}', space=vmem, size = 0x8000, scoped, tag = 'input window, operand 2, single buffered']
    #allocation7 [shape = 's32[1]{0}', space=sflag, size = 0x4, scoped, tag = 'scoped memory for tpu_custom_call.1']
    #allocation8 [shape = 'u8[65536]{0}', space=vmem, size = 0x10000, scoped, tag = 'input window, operand 4, single buffered']
    #allocation9 [shape = 'u8[32768]{0}', space=vmem, size = 0x8000, scoped, tag = 'output window, operand 0, single buffered']
    %11 = vsyncpa [#allocation4], 0
    %12 = vsyncpa [#allocation7], 0
    %13 = vsyncpa [#allocation5], 0
    // Predicated region
    $region2: #{tpu_custom_call.1} parent=1 // pred_check
      _
    $region3: #{tpu_custom_call.1} parent=1 // pred_check_branch
      %15 = sbr.rel (0) target = $region5
    $region4: #{tpu_custom_call.1} parent=1 // pred_region
      _
    $region5: #{tpu_custom_call.1} parent=1 // pred_fallthru
      _
    // Predicated region
    $region6: #{tpu_custom_call.1} parent=1 // pred_check
      _
    $region7: #{tpu_custom_call.1} parent=1 // pred_check_branch
      %17 = sbr.rel (0) target = $region9
    $region8: #{tpu_custom_call.1} parent=1 // pred_region
      %s19 = ssub.s32 2048, 2048
      %20 = vsyncadd [#allocation4], %s19
      %s21 = sshll.u32 [#allocation3], 4
      %s22 = int_to_ptr.vmem [resolvable:$true] %s21
      %27 = dma.hbm_to_vmem [thread:$0]  %s1, 2048, %s22, [#allocation4], 64, 64, 4
    $region9: #{tpu_custom_call.1} parent=1 // pred_fallthru
      _
    // Predicated region
    $region10: #{tpu_custom_call.1} parent=1 // pred_check
      _
    $region11: #{tpu_custom_call.1} parent=1 // pred_check_branch
      %29 = sbr.rel (0) target = $region13
    $region12: #{tpu_custom_call.1} parent=1 // pred_region
      %s31 = ssub.s32 1024, 1024
      %32 = vsyncadd [#allocation7], %s31
      %s33 = sshll.u32 [#allocation6], 4
      %s34 = int_to_ptr.vmem [resolvable:$true] %s33
      %39 = dma.hbm_to_vmem [thread:$0]  %s2, 1024, %s34, [#allocation7], 64, 64, 4
    $region13: #{tpu_custom_call.1} parent=1 // pred_fallthru
      _
    // Predicated region
    $region14: #{tpu_custom_call.1} parent=1 // pred_check
      _
    $region15: #{tpu_custom_call.1} parent=1 // pred_check_branch
      %41 = sbr.rel (0) target = $region17
    $region16: #{tpu_custom_call.1} parent=1 // pred_region
      _
    $region17: #{tpu_custom_call.1} parent=1 // pred_fallthru
      _
    // Predicated region
    $region18: #{tpu_custom_call.1} parent=1 // pred_check
      _
    $region19: #{tpu_custom_call.1} parent=1 // pred_check_branch
      %43 = sbr.rel (0) target = $region21
    $region20: #{tpu_custom_call.1} parent=1 // pred_region
      %s45 = ssub.s32 2048, 2048
      %46 = vsyncadd [#allocation7], %s45
      %s47 = sshll.u32 [#allocation8], 4
      %s48 = int_to_ptr.vmem [resolvable:$true] %s47
      %53 = dma.hbm_to_vmem [thread:$0]  %s4, 2048, %s48, [#allocation7], 64, 64, 4
    $region21: #{tpu_custom_call.1} parent=1 // pred_fallthru
      _
    // Predicated region
    $region22: #{tpu_custom_call.1} parent=1 // pred_check
      _
    $region23: #{tpu_custom_call.1} parent=1 // pred_check_branch
      %55 = sbr.rel (0) target = $region25
    $region24: #{tpu_custom_call.1} parent=1 // pred_region
      _
    $region25: #{tpu_custom_call.1} parent=1 // pred_fallthru
      _
    // Predicated region
    $region26: #{tpu_custom_call.1} parent=1 // pred_check
      _
    $region27: #{tpu_custom_call.1} parent=1 // pred_check_branch
      %57 = sbr.rel (0) target = $region29
    $region28: #{tpu_custom_call.1} parent=1 // pred_region
      %58 = dma.done [#allocation4], 2048
    $region29: #{tpu_custom_call.1} parent=1 // pred_fallthru
      _
    // Predicated region
    $region30: #{tpu_custom_call.1} parent=1 // pred_check
      _
    $region31: #{tpu_custom_call.1} parent=1 // pred_check_branch
      %60 = sbr.rel (0) target = $region33
    $region32: #{tpu_custom_call.1} parent=1 // pred_region
      %61 = dma.done [#allocation7], 1024
    $region33: #{tpu_custom_call.1} parent=1 // pred_fallthru
      _
    // Predicated region
    $region34: #{tpu_custom_call.1} parent=1 // pred_check
      _
    $region35: #{tpu_custom_call.1} parent=1 // pred_check_branch
      %63 = sbr.rel (0) target = $region37
    $region36: #{tpu_custom_call.1} parent=1 // pred_region
      %64 = dma.done [#allocation7], 2048
    $region37: #{tpu_custom_call.1} parent=1 // pred_fallthru
      _
    %p66 = scmp.eq.s32.totalorder 0, 0
    // Predicated region
    $region38: #{tpu_custom_call.1} parent=1 // pred_check
      %p67 = pneg %p66
    $region39: #{tpu_custom_call.1} parent=1 // pred_check_branch
      %69 = sbr.rel (%p67) target = $region41
    $region40: #{tpu_custom_call.1} parent=1 // pred_region
      %70 = vst [vmem:[#allocation2] sm:$0xff] 0.0
      %71 = vst [vmem:[#allocation2 + $0x8] sm:$0xff] 0.0
      %72 = vst [vmem:[#allocation2 + $0x10] sm:$0xff] 0.0
      %73 = vst [vmem:[#allocation2 + $0x18] sm:$0xff] 0.0
      %74 = vst [vmem:[#allocation2 + $0x20] sm:$0xff] 0.0
      %75 = vst [vmem:[#allocation2 + $0x28] sm:$0xff] 0.0
      %76 = vst [vmem:[#allocation2 + $0x30] sm:$0xff] 0.0
      %77 = vst [vmem:[#allocation2 + $0x38] sm:$0xff] 0.0
      %78 = vst [vmem:[#allocation2 + $0x40] sm:$0xff] 0.0
      %79 = vst [vmem:[#allocation2 + $0x48] sm:$0xff] 0.0
      %80 = vst [vmem:[#allocation2 + $0x50] sm:$0xff] 0.0
      %81 = vst [vmem:[#allocation2 + $0x58] sm:$0xff] 0.0
      %82 = vst [vmem:[#allocation2 + $0x60] sm:$0xff] 0.0
      %83 = vst [vmem:[#allocation2 + $0x68] sm:$0xff] 0.0
      %84 = vst [vmem:[#allocation2 + $0x70] sm:$0xff] 0.0
      %85 = vst [vmem:[#allocation2 + $0x78] sm:$0xff] 0.0
    $region41: #{tpu_custom_call.1} parent=1 // pred_fallthru
      _
    %v86 = vld [vmem:[#allocation2] sm:$0xff]
    %v87 = vld [vmem:[#allocation2 + $0x8] sm:$0xff]
    %v88 = vld [vmem:[#allocation2 + $0x10] sm:$0xff]
    %v89 = vld [vmem:[#allocation2 + $0x18] sm:$0xff]
    %v90 = vld [vmem:[#allocation2 + $0x20] sm:$0xff]
    %v91 = vld [vmem:[#allocation2 + $0x28] sm:$0xff]
    %v92 = vld [vmem:[#allocation2 + $0x30] sm:$0xff]
    %v93 = vld [vmem:[#allocation2 + $0x38] sm:$0xff]
    %v94 = vld [vmem:[#allocation2 + $0x40] sm:$0xff]
    %v95 = vld [vmem:[#allocation2 + $0x48] sm:$0xff]
    %v96 = vld [vmem:[#allocation2 + $0x50] sm:$0xff]
    %v97 = vld [vmem:[#allocation2 + $0x58] sm:$0xff]
    %v98 = vld [vmem:[#allocation2 + $0x60] sm:$0xff]
    %v99 = vld [vmem:[#allocation2 + $0x68] sm:$0xff]
    %v100 = vld [vmem:[#allocation2 + $0x70] sm:$0xff]
    %v101 = vld [vmem:[#allocation2 + $0x78] sm:$0xff]
    %v102 = vld [vmem:[%s0] sm:$0xff]
    %v103 = vld [vmem:[%s0 + $0x8] sm:$0xff]
    %v104 = vld [vmem:[%s0 + $0x10] sm:$0xff]
    %v105 = vld [vmem:[%s0 + $0x18] sm:$0xff]
    %v106 = vld [vmem:[%s0 + $0x20] sm:$0xff]
    %v107 = vld [vmem:[%s0 + $0x28] sm:$0xff]
    %v108 = vld [vmem:[%s0 + $0x30] sm:$0xff]
    %v109 = vld [vmem:[%s0 + $0x38] sm:$0xff]
    %v110 = vld [vmem:[%s0 + $0x40] sm:$0xff]
    %v111 = vld [vmem:[%s0 + $0x48] sm:$0xff]
    %v112 = vld [vmem:[%s0 + $0x50] sm:$0xff]
    %v113 = vld [vmem:[%s0 + $0x58] sm:$0xff]
    %v114 = vld [vmem:[%s0 + $0x60] sm:$0xff]
    %v115 = vld [vmem:[%s0 + $0x68] sm:$0xff]
    %v116 = vld [vmem:[%s0 + $0x70] sm:$0xff]
    %v117 = vld [vmem:[%s0 + $0x78] sm:$0xff]
    %v118 = vld [vmem:[#allocation3] sm:$0xf]
    %v119 = vld [vmem:[#allocation3 + $0x4] sm:$0xf]
    %v120 = vld [vmem:[#allocation3 + $0x8] sm:$0xf]
    %v121 = vld [vmem:[#allocation3 + $0xc] sm:$0xf]
    %v122 = vld [vmem:[#allocation3 + $0x10] sm:$0xf]
    %v123 = vld [vmem:[#allocation3 + $0x14] sm:$0xf]
    %v124 = vld [vmem:[#allocation3 + $0x18] sm:$0xf]
    %v125 = vld [vmem:[#allocation3 + $0x1c] sm:$0xf]
    %v126 = vld [vmem:[#allocation3 + $0x20] sm:$0xf]
    %v127 = vld [vmem:[#allocation3 + $0x24] sm:$0xf]
    %v128 = vld [vmem:[#allocation3 + $0x28] sm:$0xf]
    %v129 = vld [vmem:[#allocation3 + $0x2c] sm:$0xf]
    %v130 = vld [vmem:[#allocation3 + $0x30] sm:$0xf]
    %v131 = vld [vmem:[#allocation3 + $0x34] sm:$0xf]
    %v132 = vld [vmem:[#allocation3 + $0x38] sm:$0xf]
    %v133 = vld [vmem:[#allocation3 + $0x3c] sm:$0xf]
    %v134 = vld [vmem:[#allocation3 + $0x40] sm:$0xf]
    %v135 = vld [vmem:[#allocation3 + $0x44] sm:$0xf]
    %v136 = vld [vmem:[#allocation3 + $0x48] sm:$0xf]
    %v137 = vld [vmem:[#allocation3 + $0x4c] sm:$0xf]
    %v138 = vld [vmem:[#allocation3 + $0x50] sm:$0xf]
    %v139 = vld [vmem:[#allocation3 + $0x54] sm:$0xf]
    %v140 = vld [vmem:[#allocation3 + $0x58] sm:$0xf]
    %v141 = vld [vmem:[#allocation3 + $0x5c] sm:$0xf]
    %v142 = vld [vmem:[#allocation3 + $0x60] sm:$0xf]
    %v143 = vld [vmem:[#allocation3 + $0x64] sm:$0xf]
    %v144 = vld [vmem:[#allocation3 + $0x68] sm:$0xf]
    %v145 = vld [vmem:[#allocation3 + $0x6c] sm:$0xf]
    %v146 = vld [vmem:[#allocation3 + $0x70] sm:$0xf]
    %v147 = vld [vmem:[#allocation3 + $0x74] sm:$0xf]
    %v148 = vld [vmem:[#allocation3 + $0x78] sm:$0xf]
    %v149 = vld [vmem:[#allocation3 + $0x7c] sm:$0xf]
    %v166 = vunpack.c.l.b16 %v102
    %v167 = vunpack.c.h.b16 %v102
    %v168 = vunpack.c.l.b16 %v103
    %v169 = vunpack.c.h.b16 %v103
    %v170 = vunpack.c.l.b16 %v104
    %v171 = vunpack.c.h.b16 %v104
    %v172 = vunpack.c.l.b16 %v105
    %v173 = vunpack.c.h.b16 %v105
    %v174 = vunpack.c.l.b16 %v106
    %v175 = vunpack.c.h.b16 %v106
    %v176 = vunpack.c.l.b16 %v107
    %v177 = vunpack.c.h.b16 %v107
    %v178 = vunpack.c.l.b16 %v108
    %v179 = vunpack.c.h.b16 %v108
    %v180 = vunpack.c.l.b16 %v109
    %v181 = vunpack.c.h.b16 %v109
    %v182 = vunpack.c.l.b16 %v110
    %v183 = vunpack.c.h.b16 %v110
    %v184 = vunpack.c.l.b16 %v111
    %v185 = vunpack.c.h.b16 %v111
    %v186 = vunpack.c.l.b16 %v112
    %v187 = vunpack.c.h.b16 %v112
    %v188 = vunpack.c.l.b16 %v113
    %v189 = vunpack.c.h.b16 %v113
    %v190 = vunpack.c.l.b16 %v114
    %v191 = vunpack.c.h.b16 %v114
    %v192 = vunpack.c.l.b16 %v115
    %v193 = vunpack.c.h.b16 %v115
    %v194 = vunpack.c.l.b16 %v116
    %v195 = vunpack.c.h.b16 %v116
    %v196 = vunpack.c.l.b16 %v117
    %v197 = vunpack.c.h.b16 %v117
    %v198 = vpack.c.b16 %v168, %v166
    %v199 = vpack.c.b16 %v169, %v167
    %v200 = vpack.c.b16 %v172, %v170
    %v201 = vpack.c.b16 %v173, %v171
    %v202 = vpack.c.b16 %v176, %v174
    %v203 = vpack.c.b16 %v177, %v175
    %v204 = vpack.c.b16 %v180, %v178
    %v205 = vpack.c.b16 %v181, %v179
    %v206 = vpack.c.b16 %v184, %v182
    %v207 = vpack.c.b16 %v185, %v183
    %v208 = vpack.c.b16 %v188, %v186
    %v209 = vpack.c.b16 %v189, %v187
    %v210 = vpack.c.b16 %v192, %v190
    %v211 = vpack.c.b16 %v193, %v191
    %v212 = vpack.c.b16 %v196, %v194
    %v213 = vpack.c.b16 %v197, %v195
    %v262 = vunpack.c.l.b16 %v118
    %v263 = vunpack.c.l.b16 %v119
    %v264 = vunpack.c.l.b16 %v120
    %v265 = vunpack.c.l.b16 %v121
    %v266 = vunpack.c.l.b16 %v122
    %v267 = vunpack.c.l.b16 %v123
    %v268 = vunpack.c.l.b16 %v124
    %v269 = vunpack.c.l.b16 %v125
    %v270 = vunpack.c.l.b16 %v126
    %v271 = vunpack.c.l.b16 %v127
    %v272 = vunpack.c.l.b16 %v128
    %v273 = vunpack.c.l.b16 %v129
    %v274 = vunpack.c.l.b16 %v130
    %v275 = vunpack.c.l.b16 %v131
    %v276 = vunpack.c.l.b16 %v132
    %v277 = vunpack.c.l.b16 %v133
    %v278 = vunpack.c.l.b16 %v134
    %v279 = vunpack.c.l.b16 %v135
    %v280 = vunpack.c.l.b16 %v136
    %v281 = vunpack.c.l.b16 %v137
    %v282 = vunpack.c.l.b16 %v138
    %v283 = vunpack.c.l.b16 %v139
    %v284 = vunpack.c.l.b16 %v140
    %v285 = vunpack.c.l.b16 %v141
    %v286 = vunpack.c.l.b16 %v142
    %v287 = vunpack.c.l.b16 %v143
    %v288 = vunpack.c.l.b16 %v144
    %v289 = vunpack.c.l.b16 %v145
    %v290 = vunpack.c.l.b16 %v146
    %v291 = vunpack.c.l.b16 %v147
    %v292 = vunpack.c.l.b16 %v148
    %v293 = vunpack.c.l.b16 %v149
    %v294 = vpack.c.b16 %v263, %v262
    %v295 = vpack.c.b16 %v265, %v264
    %v296 = vpack.c.b16 %v267, %v266
    %v297 = vpack.c.b16 %v269, %v268
    %v298 = vpack.c.b16 %v271, %v270
    %v299 = vpack.c.b16 %v273, %v272
    %v300 = vpack.c.b16 %v275, %v274
    %v301 = vpack.c.b16 %v277, %v276
    %v302 = vpack.c.b16 %v279, %v278
    %v303 = vpack.c.b16 %v281, %v280
    %v304 = vpack.c.b16 %v283, %v282
    %v305 = vpack.c.b16 %v285, %v284
    %v306 = vpack.c.b16 %v287, %v286
    %v307 = vpack.c.b16 %v289, %v288
    %v308 = vpack.c.b16 %v291, %v290
    %v309 = vpack.c.b16 %v293, %v292
    %326 = vmatprep.subr.bf16.mxu0 0
    %327 = vmatpush1.bf16.msra.mxu0 %v294
    %328 = vmatprep.subr.bf16.mxu0 0
    %329 = vmatpush1.bf16.msra.mxu0 %v295
    %330 = vmatprep.subr.bf16.mxu0 0
    %331 = vmatpush1.bf16.msra.mxu0 %v296
    %332 = vmatprep.subr.bf16.mxu0 0
    %333 = vmatpush1.bf16.msra.mxu0 %v297
    %334 = vmatprep.subr.bf16.mxu0 0
    %335 = vmatpush1.bf16.msra.mxu0 %v298
    %336 = vmatprep.subr.bf16.mxu0 0
    %337 = vmatpush1.bf16.msra.mxu0 %v299
    %338 = vmatprep.subr.bf16.mxu0 0
    %339 = vmatpush1.bf16.msra.mxu0 %v300
    %340 = vmatprep.subr.bf16.mxu0 0
    %341 = vmatpush1.bf16.msra.mxu0 %v301
    %342 = vmatprep.subr.bf16.mxu0 0
    %343 = vmatpush1.bf16.msra.mxu0 %v302
    %344 = vmatprep.subr.bf16.mxu0 0
    %345 = vmatpush1.bf16.msra.mxu0 %v303
    %346 = vmatprep.subr.bf16.mxu0 0
    %347 = vmatpush1.bf16.msra.mxu0 %v304
    %348 = vmatprep.subr.bf16.mxu0 0
    %349 = vmatpush1.bf16.msra.mxu0 %v305
    %350 = vmatprep.subr.bf16.mxu0 0
    %351 = vmatpush1.bf16.msra.mxu0 %v306
    %352 = vmatprep.subr.bf16.mxu0 0
    %353 = vmatpush1.bf16.msra.mxu0 %v307
    %354 = vmatprep.subr.bf16.mxu0 0
    %355 = vmatpush1.bf16.msra.mxu0 %v308
    %356 = vmatprep.subr.bf16.mxu0 0
    %357 = vmatpush1.bf16.msra.mxu0 %v309
    %358 = vmatprep.mubr.bf16.mxu0 %v199
    %359 = vmatmul.mubr.bf16.gmra.mrb[0].mxu0 %v198
    %v360 = vpop.f32.mrb[0].mxu0
    %v361 = vadd.f32 0.0, %v360
    %v362 = vpop.f32.mrb[0].mxu0
    %v363 = vpop.f32.mrb[0].mxu0
    %v364 = vadd.f32 0.0, %v363
    %v365 = vpop.f32.mrb[0].mxu0
    %366 = vmatprep.mubr.bf16.mxu0 %v201
    %367 = vmatmul.mubr.bf16.gmra.mrb[0].mxu0 %v200
    %v368 = vpop.f32.mrb[0].mxu0
    %v369 = vadd.f32 0.0, %v368
    %v370 = vpop.f32.mrb[0].mxu0
    %v371 = vpop.f32.mrb[0].mxu0
    %v372 = vadd.f32 0.0, %v371
    %v373 = vpop.f32.mrb[0].mxu0
    %374 = vmatprep.mubr.bf16.mxu0 %v203
    %375 = vmatmul.mubr.bf16.gmra.mrb[0].mxu0 %v202
    %v376 = vpop.f32.mrb[0].mxu0
    %v377 = vadd.f32 0.0, %v376
    %v378 = vpop.f32.mrb[0].mxu0
    %v379 = vpop.f32.mrb[0].mxu0
    %v380 = vadd.f32 0.0, %v379
    %v381 = vpop.f32.mrb[0].mxu0
    %382 = vmatprep.mubr.bf16.mxu0 %v205
    %383 = vmatmul.mubr.bf16.gmra.mrb[0].mxu0 %v204
    %v384 = vpop.f32.mrb[0].mxu0
    %v385 = vadd.f32 0.0, %v384
    %v386 = vpop.f32.mrb[0].mxu0
    %v387 = vpop.f32.mrb[0].mxu0
    %v388 = vadd.f32 0.0, %v387
    %v389 = vpop.f32.mrb[0].mxu0
    %390 = vmatprep.mubr.bf16.mxu0 %v207
    %391 = vmatmul.mubr.bf16.gmra.mrb[0].mxu0 %v206
    %v392 = vpop.f32.mrb[0].mxu0
    %v393 = vadd.f32 0.0, %v392
    %v394 = vpop.f32.mrb[0].mxu0
    %v395 = vpop.f32.mrb[0].mxu0
    %v396 = vadd.f32 0.0, %v395
    %v397 = vpop.f32.mrb[0].mxu0
    %398 = vmatprep.mubr.bf16.mxu0 %v209
    %399 = vmatmul.mubr.bf16.gmra.mrb[0].mxu0 %v208
    %v400 = vpop.f32.mrb[0].mxu0
    %v401 = vadd.f32 0.0, %v400
    %v402 = vpop.f32.mrb[0].mxu0
    %v403 = vpop.f32.mrb[0].mxu0
    %v404 = vadd.f32 0.0, %v403
    %v405 = vpop.f32.mrb[0].mxu0
    %406 = vmatprep.mubr.bf16.mxu0 %v211
    %407 = vmatmul.mubr.bf16.gmra.mrb[0].mxu0 %v210
    %v408 = vpop.f32.mrb[0].mxu0
    %v409 = vadd.f32 0.0, %v408
    %v410 = vpop.f32.mrb[0].mxu0
    %v411 = vpop.f32.mrb[0].mxu0
    %v412 = vadd.f32 0.0, %v411
    %v413 = vpop.f32.mrb[0].mxu0
    %414 = vmatprep.mubr.bf16.mxu0 %v213
    %415 = vmatmul.mubr.bf16.gmra.mrb[0].mxu0 %v212
    %v416 = vpop.f32.mrb[0].mxu0
    %v417 = vadd.f32 0.0, %v416
    %v418 = vpop.f32.mrb[0].mxu0
    %v419 = vpop.f32.mrb[0].mxu0
    %v420 = vadd.f32 0.0, %v419
    %v421 = vpop.f32.mrb[0].mxu0
    %422 = vdwg.mxu0
    %v423 = vadd.f32 %v86, %v361
    %v424 = vadd.f32 %v87, %v364
    %v425 = vadd.f32 %v88, %v369
    %v426 = vadd.f32 %v89, %v372
    %v427 = vadd.f32 %v90, %v377
    %v428 = vadd.f32 %v91, %v380
    %v429 = vadd.f32 %v92, %v385
    %v430 = vadd.f32 %v93, %v388
    %v431 = vadd.f32 %v94, %v393
    %v432 = vadd.f32 %v95, %v396
    %v433 = vadd.f32 %v96, %v401
    %v434 = vadd.f32 %v97, %v404
    %v435 = vadd.f32 %v98, %v409
    %v436 = vadd.f32 %v99, %v412
    %v437 = vadd.f32 %v100, %v417
    %v438 = vadd.f32 %v101, %v420
    %439 = vst [vmem:[#allocation2] sm:$0xff] %v423
    %440 = vst [vmem:[#allocation2 + $0x8] sm:$0xff] %v424
    %441 = vst [vmem:[#allocation2 + $0x10] sm:$0xff] %v425
    %442 = vst [vmem:[#allocation2 + $0x18] sm:$0xff] %v426
    %443 = vst [vmem:[#allocation2 + $0x20] sm:$0xff] %v427
    %444 = vst [vmem:[#allocation2 + $0x28] sm:$0xff] %v428
    %445 = vst [vmem:[#allocation2 + $0x30] sm:$0xff] %v429
    %446 = vst [vmem:[#allocation2 + $0x38] sm:$0xff] %v430
    %447 = vst [vmem:[#allocation2 + $0x40] sm:$0xff] %v431
    %448 = vst [vmem:[#allocation2 + $0x48] sm:$0xff] %v432
    %449 = vst [vmem:[#allocation2 + $0x50] sm:$0xff] %v433
    %450 = vst [vmem:[#allocation2 + $0x58] sm:$0xff] %v434
    %451 = vst [vmem:[#allocation2 + $0x60] sm:$0xff] %v435
    %452 = vst [vmem:[#allocation2 + $0x68] sm:$0xff] %v436
    %453 = vst [vmem:[#allocation2 + $0x70] sm:$0xff] %v437
    %454 = vst [vmem:[#allocation2 + $0x78] sm:$0xff] %v438
    // Predicated region
    $region42: #{tpu_custom_call.1} parent=1 // pred_check
      %p455 = pneg %p66
    $region43: #{tpu_custom_call.1} parent=1 // pred_check_branch
      %457 = sbr.rel (%p455) target = $region45
    $region44: #{tpu_custom_call.1} parent=1 // pred_region
      %v458 = vld [vmem:[#allocation2] sm:$0xff]
      %v459 = vld [vmem:[#allocation2 + $0x8] sm:$0xff]
      %v460 = vld [vmem:[#allocation2 + $0x10] sm:$0xff]
      %v461 = vld [vmem:[#allocation2 + $0x18] sm:$0xff]
      %v462 = vld [vmem:[#allocation2 + $0x20] sm:$0xff]
      %v463 = vld [vmem:[#allocation2 + $0x28] sm:$0xff]
      %v464 = vld [vmem:[#allocation2 + $0x30] sm:$0xff]
      %v465 = vld [vmem:[#allocation2 + $0x38] sm:$0xff]
      %v466 = vld [vmem:[#allocation2 + $0x40] sm:$0xff]
      %v467 = vld [vmem:[#allocation2 + $0x48] sm:$0xff]
      %v468 = vld [vmem:[#allocation2 + $0x50] sm:$0xff]
      %v469 = vld [vmem:[#allocation2 + $0x58] sm:$0xff]
      %v470 = vld [vmem:[#allocation2 + $0x60] sm:$0xff]
      %v471 = vld [vmem:[#allocation2 + $0x68] sm:$0xff]
      %v472 = vld [vmem:[#allocation2 + $0x70] sm:$0xff]
      %v473 = vld [vmem:[#allocation2 + $0x78] sm:$0xff]
      %v474 = vld [vmem:[%s3] sm:$0xff]
      %v475 = vld [vmem:[%s3 + $0x8] sm:$0xff]
      %v476 = vld [vmem:[%s3 + $0x10] sm:$0xff]
      %v477 = vld [vmem:[%s3 + $0x18] sm:$0xff]
      %v478 = vld [vmem:[%s3 + $0x20] sm:$0xff]
      %v479 = vld [vmem:[%s3 + $0x28] sm:$0xff]
      %v480 = vld [vmem:[%s3 + $0x30] sm:$0xff]
      %v481 = vld [vmem:[%s3 + $0x38] sm:$0xff]
      %v482 = vld [vmem:[%s3 + $0x40] sm:$0xff]
      %v483 = vld [vmem:[%s3 + $0x48] sm:$0xff]
      %v484 = vld [vmem:[%s3 + $0x50] sm:$0xff]
      %v485 = vld [vmem:[%s3 + $0x58] sm:$0xff]
      %v486 = vld [vmem:[%s3 + $0x60] sm:$0xff]
      %v487 = vld [vmem:[%s3 + $0x68] sm:$0xff]
      %v488 = vld [vmem:[%s3 + $0x70] sm:$0xff]
      %v489 = vld [vmem:[%s3 + $0x78] sm:$0xff]
      %491 = vset.pattern.permute.xlu0 0
      %492 = vperm.xlu0 %491, %v474
      %v493 = vpop.permute.xlu0 %492
      %496 = vset.pattern.permute.xlu0 0
      %497 = vperm.xlu0 %496, %v475
      %v498 = vpop.permute.xlu0 %497
      %501 = vset.pattern.permute.xlu0 0
      %502 = vperm.xlu0 %501, %v476
      %v503 = vpop.permute.xlu0 %502
      %506 = vset.pattern.permute.xlu0 0
      %507 = vperm.xlu0 %506, %v477
      %v508 = vpop.permute.xlu0 %507
      %511 = vset.pattern.permute.xlu0 0
      %512 = vperm.xlu0 %511, %v478
      %v513 = vpop.permute.xlu0 %512
      %516 = vset.pattern.permute.xlu0 0
      %517 = vperm.xlu0 %516, %v479
      %v518 = vpop.permute.xlu0 %517
      %521 = vset.pattern.permute.xlu0 0
      %522 = vperm.xlu0 %521, %v480
      %v523 = vpop.permute.xlu0 %522
      %526 = vset.pattern.permute.xlu0 0
      %527 = vperm.xlu0 %526, %v481
      %v528 = vpop.permute.xlu0 %527
      %531 = vset.pattern.permute.xlu0 0
      %532 = vperm.xlu0 %531, %v482
      %v533 = vpop.permute.xlu0 %532
      %536 = vset.pattern.permute.xlu0 0
      %537 = vperm.xlu0 %536, %v483
      %v538 = vpop.permute.xlu0 %537
      %541 = vset.pattern.permute.xlu0 0
      %542 = vperm.xlu0 %541, %v484
      %v543 = vpop.permute.xlu0 %542
      %546 = vset.pattern.permute.xlu0 0
      %547 = vperm.xlu0 %546, %v485
      %v548 = vpop.permute.xlu0 %547
      %551 = vset.pattern.permute.xlu0 0
      %552 = vperm.xlu0 %551, %v486
      %v553 = vpop.permute.xlu0 %552
      %556 = vset.pattern.permute.xlu0 0
      %557 = vperm.xlu0 %556, %v487
      %v558 = vpop.permute.xlu0 %557
      %561 = vset.pattern.permute.xlu0 0
      %562 = vperm.xlu0 %561, %v488
      %v563 = vpop.permute.xlu0 %562
      %566 = vset.pattern.permute.xlu0 0
      %567 = vperm.xlu0 %566, %v489
      %v568 = vpop.permute.xlu0 %567
      %v570 = vmul.f32 %v458, %v493
      %v571 = vmul.f32 %v459, %v498
      %v572 = vmul.f32 %v460, %v503
      %v573 = vmul.f32 %v461, %v508
      %v574 = vmul.f32 %v462, %v513
      %v575 = vmul.f32 %v463, %v518
      %v576 = vmul.f32 %v464, %v523
      %v577 = vmul.f32 %v465, %v528
      %v578 = vmul.f32 %v466, %v533
      %v579 = vmul.f32 %v467, %v538
      %v580 = vmul.f32 %v468, %v543
      %v581 = vmul.f32 %v469, %v548
      %v582 = vmul.f32 %v470, %v553
      %v583 = vmul.f32 %v471, %v558
      %v584 = vmul.f32 %v472, %v563
      %v585 = vmul.f32 %v473, %v568
      %v586 = vpack.c.bf16 %v571, %v570
      %v587 = vpack.c.bf16 %v573, %v572
      %v588 = vpack.c.bf16 %v575, %v574
      %v589 = vpack.c.bf16 %v577, %v576
      %v590 = vpack.c.bf16 %v579, %v578
      %v591 = vpack.c.bf16 %v581, %v580
      %v592 = vpack.c.bf16 %v583, %v582
      %v593 = vpack.c.bf16 %v585, %v584
      %v594 = vld [vmem:[#allocation8] sm:$0xf]
      %v595 = vld [vmem:[#allocation8 + $0x4] sm:$0xf]
      %v596 = vld [vmem:[#allocation8 + $0x8] sm:$0xf]
      %v597 = vld [vmem:[#allocation8 + $0xc] sm:$0xf]
      %v598 = vld [vmem:[#allocation8 + $0x10] sm:$0xf]
      %v599 = vld [vmem:[#allocation8 + $0x14] sm:$0xf]
      %v600 = vld [vmem:[#allocation8 + $0x18] sm:$0xf]
      %v601 = vld [vmem:[#allocation8 + $0x1c] sm:$0xf]
      %v602 = vld [vmem:[#allocation8 + $0x20] sm:$0xf]
      %v603 = vld [vmem:[#allocation8 + $0x24] sm:$0xf]
      %v604 = vld [vmem:[#allocation8 + $0x28] sm:$0xf]
      %v605 = vld [vmem:[#allocation8 + $0x2c] sm:$0xf]
      %v606 = vld [vmem:[#allocation8 + $0x30] sm:$0xf]
      %v607 = vld [vmem:[#allocation8 + $0x34] sm:$0xf]
      %v608 = vld [vmem:[#allocation8 + $0x38] sm:$0xf]
      %v609 = vld [vmem:[#allocation8 + $0x3c] sm:$0xf]
      %v610 = vld [vmem:[#allocation6] sm:$0xf]
      %v611 = vld [vmem:[#allocation6 + $0x4] sm:$0xf]
      %v612 = vld [vmem:[#allocation6 + $0x8] sm:$0xf]
      %v613 = vld [vmem:[#allocation6 + $0xc] sm:$0xf]
      %v614 = vld [vmem:[#allocation6 + $0x10] sm:$0xf]
      %v615 = vld [vmem:[#allocation6 + $0x14] sm:$0xf]
      %v616 = vld [vmem:[#allocation6 + $0x18] sm:$0xf]
      %v617 = vld [vmem:[#allocation6 + $0x1c] sm:$0xf]
      %v618 = vld [vmem:[#allocation6 + $0x20] sm:$0xf]
      %v619 = vld [vmem:[#allocation6 + $0x24] sm:$0xf]
      %v620 = vld [vmem:[#allocation6 + $0x28] sm:$0xf]
      %v621 = vld [vmem:[#allocation6 + $0x2c] sm:$0xf]
      %v622 = vld [vmem:[#allocation6 + $0x30] sm:$0xf]
      %v623 = vld [vmem:[#allocation6 + $0x34] sm:$0xf]
      %v624 = vld [vmem:[#allocation6 + $0x38] sm:$0xf]
      %v625 = vld [vmem:[#allocation6 + $0x3c] sm:$0xf]
      %s626 = scalar_lea.vmem [#allocation8], 64
      %v627 = vld [vmem:[%s626] sm:$0xf]
      %v628 = vld [vmem:[%s626 + $0x4] sm:$0xf]
      %v629 = vld [vmem:[%s626 + $0x8] sm:$0xf]
      %v630 = vld [vmem:[%s626 + $0xc] sm:$0xf]
      %v631 = vld [vmem:[%s626 + $0x10] sm:$0xf]
      %v632 = vld [vmem:[%s626 + $0x14] sm:$0xf]
      %v633 = vld [vmem:[%s626 + $0x18] sm:$0xf]
      %v634 = vld [vmem:[%s626 + $0x1c] sm:$0xf]
      %v635 = vld [vmem:[%s626 + $0x20] sm:$0xf]
      %v636 = vld [vmem:[%s626 + $0x24] sm:$0xf]
      %v637 = vld [vmem:[%s626 + $0x28] sm:$0xf]
      %v638 = vld [vmem:[%s626 + $0x2c] sm:$0xf]
      %v639 = vld [vmem:[%s626 + $0x30] sm:$0xf]
      %v640 = vld [vmem:[%s626 + $0x34] sm:$0xf]
      %v641 = vld [vmem:[%s626 + $0x38] sm:$0xf]
      %v642 = vld [vmem:[%s626 + $0x3c] sm:$0xf]
      %v659 = vunpack.c.l.b16 %v610
      %v660 = vunpack.c.l.b16 %v611
      %v661 = vunpack.c.l.b16 %v612
      %v662 = vunpack.c.l.b16 %v613
      %v663 = vunpack.c.l.b16 %v614
      %v664 = vunpack.c.l.b16 %v615
      %v665 = vunpack.c.l.b16 %v616
      %v666 = vunpack.c.l.b16 %v617
      %v667 = vunpack.c.l.b16 %v618
      %v668 = vunpack.c.l.b16 %v619
      %v669 = vunpack.c.l.b16 %v620
      %v670 = vunpack.c.l.b16 %v621
      %v671 = vunpack.c.l.b16 %v622
      %v672 = vunpack.c.l.b16 %v623
      %v673 = vunpack.c.l.b16 %v624
      %v674 = vunpack.c.l.b16 %v625
      %v675 = vpack.c.b16 %v660, %v659
      %v676 = vpack.c.b16 %v662, %v661
      %v677 = vpack.c.b16 %v664, %v663
      %v678 = vpack.c.b16 %v666, %v665
      %v679 = vpack.c.b16 %v668, %v667
      %v680 = vpack.c.b16 %v670, %v669
      %v681 = vpack.c.b16 %v672, %v671
      %v682 = vpack.c.b16 %v674, %v673
      %v707 = vunpack.c.l.b16 %v627
      %v708 = vunpack.c.l.b16 %v628
      %v709 = vunpack.c.l.b16 %v629
      %v710 = vunpack.c.l.b16 %v630
      %v711 = vunpack.c.l.b16 %v631
      %v712 = vunpack.c.l.b16 %v632
      %v713 = vunpack.c.l.b16 %v633
      %v714 = vunpack.c.l.b16 %v634
      %v715 = vunpack.c.l.b16 %v635
      %v716 = vunpack.c.l.b16 %v636
      %v717 = vunpack.c.l.b16 %v637
      %v718 = vunpack.c.l.b16 %v638
      %v719 = vunpack.c.l.b16 %v639
      %v720 = vunpack.c.l.b16 %v640
      %v721 = vunpack.c.l.b16 %v641
      %v722 = vunpack.c.l.b16 %v642
      %v723 = vpack.c.b16 %v708, %v707
      %v724 = vpack.c.b16 %v710, %v709
      %v725 = vpack.c.b16 %v712, %v711
      %v726 = vpack.c.b16 %v714, %v713
      %v727 = vpack.c.b16 %v716, %v715
      %v728 = vpack.c.b16 %v718, %v717
      %v729 = vpack.c.b16 %v720, %v719
      %v730 = vpack.c.b16 %v722, %v721
      %739 = vmatprep.subr.bf16.mxu0 0
      %740 = vmatpush1.bf16.msra.mxu0 %v723
      %741 = vmatprep.subr.bf16.mxu0 0
      %742 = vmatpush1.bf16.msra.mxu0 %v724
      %743 = vmatprep.subr.bf16.mxu0 0
      %744 = vmatpush1.bf16.msra.mxu0 %v725
      %745 = vmatprep.subr.bf16.mxu0 0
      %746 = vmatpush1.bf16.msra.mxu0 %v726
      %747 = vmatprep.subr.bf16.mxu0 0
      %748 = vmatpush1.bf16.msra.mxu0 %v727
      %749 = vmatprep.subr.bf16.mxu0 0
      %750 = vmatpush1.bf16.msra.mxu0 %v728
      %751 = vmatprep.subr.bf16.mxu0 0
      %752 = vmatpush1.bf16.msra.mxu0 %v729
      %753 = vmatprep.subr.bf16.mxu0 0
      %754 = vmatpush1.bf16.msra.mxu0 %v730
      %755 = vmatprep.subr.bf16.mxu0 0
      %756 = vmatpush1.bf16.msra.mxu0 0
      %757 = vmatprep.subr.bf16.mxu0 0
      %758 = vmatpush1.bf16.msra.mxu0 0
      %759 = vmatprep.subr.bf16.mxu0 0
      %760 = vmatpush1.bf16.msra.mxu0 0
      %761 = vmatprep.subr.bf16.mxu0 0
      %762 = vmatpush1.bf16.msra.mxu0 0
      %763 = vmatprep.subr.bf16.mxu0 0
      %764 = vmatpush1.bf16.msra.mxu0 0
      %765 = vmatprep.subr.bf16.mxu0 0
      %766 = vmatpush1.bf16.msra.mxu0 0
      %767 = vmatprep.subr.bf16.mxu0 0
      %768 = vmatpush1.bf16.msra.mxu0 0
      %769 = vmatprep.subr.bf16.mxu0 0
      %770 = vmatpush1.bf16.msra.mxu0 0
      %771 = vmatprep.mubr.bf16.mxu0 0
      %772 = vmatmul.mubr.bf16.gmra.mrb[0].mxu0 %v675
      %v773 = vpop.f32.mrb[0].mxu0
      %v774 = vadd.f32 0.0, %v773
      %v775 = vpop.f32.mrb[0].mxu0
      %v776 = vpop.f32.mrb[0].mxu0
      %v777 = vadd.f32 0.0, %v776
      %v778 = vpop.f32.mrb[0].mxu0
      %779 = vmatprep.mubr.bf16.mxu0 0
      %780 = vmatmul.mubr.bf16.gmra.mrb[0].mxu0 %v676
      %v781 = vpop.f32.mrb[0].mxu0
      %v782 = vadd.f32 0.0, %v781
      %v783 = vpop.f32.mrb[0].mxu0
      %v784 = vpop.f32.mrb[0].mxu0
      %v785 = vadd.f32 0.0, %v784
      %v786 = vpop.f32.mrb[0].mxu0
      %787 = vmatprep.mubr.bf16.mxu0 0
      %788 = vmatmul.mubr.bf16.gmra.mrb[0].mxu0 %v677
      %v789 = vpop.f32.mrb[0].mxu0
      %v790 = vadd.f32 0.0, %v789
      %v791 = vpop.f32.mrb[0].mxu0
      %v792 = vpop.f32.mrb[0].mxu0
      %v793 = vadd.f32 0.0, %v792
      %v794 = vpop.f32.mrb[0].mxu0
      %795 = vmatprep.mubr.bf16.mxu0 0
      %796 = vmatmul.mubr.bf16.gmra.mrb[0].mxu0 %v678
      %v797 = vpop.f32.mrb[0].mxu0
      %v798 = vadd.f32 0.0, %v797
      %v799 = vpop.f32.mrb[0].mxu0
      %v800 = vpop.f32.mrb[0].mxu0
      %v801 = vadd.f32 0.0, %v800
      %v802 = vpop.f32.mrb[0].mxu0
      %803 = vmatprep.mubr.bf16.mxu0 0
      %804 = vmatmul.mubr.bf16.gmra.mrb[0].mxu0 %v679
      %v805 = vpop.f32.mrb[0].mxu0
      %v806 = vadd.f32 0.0, %v805
      %v807 = vpop.f32.mrb[0].mxu0
      %v808 = vpop.f32.mrb[0].mxu0
      %v809 = vadd.f32 0.0, %v808
      %v810 = vpop.f32.mrb[0].mxu0
      %811 = vmatprep.mubr.bf16.mxu0 0
      %812 = vmatmul.mubr.bf16.gmra.mrb[0].mxu0 %v680
      %v813 = vpop.f32.mrb[0].mxu0
      %v814 = vadd.f32 0.0, %v813
      %v815 = vpop.f32.mrb[0].mxu0
      %v816 = vpop.f32.mrb[0].mxu0
      %v817 = vadd.f32 0.0, %v816
      %v818 = vpop.f32.mrb[0].mxu0
      %819 = vmatprep.mubr.bf16.mxu0 0
      %820 = vmatmul.mubr.bf16.gmra.mrb[0].mxu0 %v681
      %v821 = vpop.f32.mrb[0].mxu0
      %v822 = vadd.f32 0.0, %v821
      %v823 = vpop.f32.mrb[0].mxu0
      %v824 = vpop.f32.mrb[0].mxu0
      %v825 = vadd.f32 0.0, %v824
      %v826 = vpop.f32.mrb[0].mxu0
      %827 = vmatprep.mubr.bf16.mxu0 0
      %828 = vmatmul.mubr.bf16.gmra.mrb[0].mxu0 %v682
      %v829 = vpop.f32.mrb[0].mxu0
      %v830 = vadd.f32 0.0, %v829
      %v831 = vpop.f32.mrb[0].mxu0
      %v832 = vpop.f32.mrb[0].mxu0
      %v833 = vadd.f32 0.0, %v832
      %v834 = vpop.f32.mrb[0].mxu0
      %835 = vdwg.mxu0
      %v852 = vunpack.c.l.b16 %v594
      %v853 = vunpack.c.l.b16 %v595
      %v854 = vunpack.c.l.b16 %v596
      %v855 = vunpack.c.l.b16 %v597
      %v856 = vunpack.c.l.b16 %v598
      %v857 = vunpack.c.l.b16 %v599
      %v858 = vunpack.c.l.b16 %v600
      %v859 = vunpack.c.l.b16 %v601
      %v860 = vunpack.c.l.b16 %v602
      %v861 = vunpack.c.l.b16 %v603
      %v862 = vunpack.c.l.b16 %v604
      %v863 = vunpack.c.l.b16 %v605
      %v864 = vunpack.c.l.b16 %v606
      %v865 = vunpack.c.l.b16 %v607
      %v866 = vunpack.c.l.b16 %v608
      %v867 = vunpack.c.l.b16 %v609
      %v868 = vpack.c.b16 %v853, %v852
      %v869 = vpack.c.b16 %v855, %v854
      %v870 = vpack.c.b16 %v857, %v856
      %v871 = vpack.c.b16 %v859, %v858
      %v872 = vpack.c.b16 %v861, %v860
      %v873 = vpack.c.b16 %v863, %v862
      %v874 = vpack.c.b16 %v865, %v864
      %v875 = vpack.c.b16 %v867, %v866
      %884 = vmatprep.subr.bf16.mxu0 0
      %885 = vmatpush1.bf16.msra.mxu0 %v868
      %886 = vmatprep.subr.bf16.mxu0 0
      %887 = vmatpush1.bf16.msra.mxu0 %v869
      %888 = vmatprep.subr.bf16.mxu0 0
      %889 = vmatpush1.bf16.msra.mxu0 %v870
      %890 = vmatprep.subr.bf16.mxu0 0
      %891 = vmatpush1.bf16.msra.mxu0 %v871
      %892 = vmatprep.subr.bf16.mxu0 0
      %893 = vmatpush1.bf16.msra.mxu0 %v872
      %894 = vmatprep.subr.bf16.mxu0 0
      %895 = vmatpush1.bf16.msra.mxu0 %v873
      %896 = vmatprep.subr.bf16.mxu0 0
      %897 = vmatpush1.bf16.msra.mxu0 %v874
      %898 = vmatprep.subr.bf16.mxu0 0
      %899 = vmatpush1.bf16.msra.mxu0 %v875
      %900 = vmatprep.subr.bf16.mxu0 0
      %901 = vmatpush1.bf16.msra.mxu0 0
      %902 = vmatprep.subr.bf16.mxu0 0
      %903 = vmatpush1.bf16.msra.mxu0 0
      %904 = vmatprep.subr.bf16.mxu0 0
      %905 = vmatpush1.bf16.msra.mxu0 0
      %906 = vmatprep.subr.bf16.mxu0 0
      %907 = vmatpush1.bf16.msra.mxu0 0
      %908 = vmatprep.subr.bf16.mxu0 0
      %909 = vmatpush1.bf16.msra.mxu0 0
      %910 = vmatprep.subr.bf16.mxu0 0
      %911 = vmatpush1.bf16.msra.mxu0 0
      %912 = vmatprep.subr.bf16.mxu0 0
      %913 = vmatpush1.bf16.msra.mxu0 0
      %914 = vmatprep.subr.bf16.mxu0 0
      %915 = vmatpush1.bf16.msra.mxu0 0
      %916 = vmatprep.mubr.bf16.mxu0 0
      %917 = vmatmul.mubr.bf16.gmra.mrb[0].mxu0 %v586
      %v918 = vpop.f32.mrb[0].mxu0
      %v919 = vadd.f32 %v774, %v918
      %v920 = vpop.f32.mrb[0].mxu0
      %v921 = vpop.f32.mrb[0].mxu0
      %v922 = vadd.f32 %v777, %v921
      %v923 = vpop.f32.mrb[0].mxu0
      %924 = vmatprep.mubr.bf16.mxu0 0
      %925 = vmatmul.mubr.bf16.gmra.mrb[0].mxu0 %v587
      %v926 = vpop.f32.mrb[0].mxu0
      %v927 = vadd.f32 %v782, %v926
      %v928 = vpop.f32.mrb[0].mxu0
      %v929 = vpop.f32.mrb[0].mxu0
      %v930 = vadd.f32 %v785, %v929
      %v931 = vpop.f32.mrb[0].mxu0
      %932 = vmatprep.mubr.bf16.mxu0 0
      %933 = vmatmul.mubr.bf16.gmra.mrb[0].mxu0 %v588
      %v934 = vpop.f32.mrb[0].mxu0
      %v935 = vadd.f32 %v790, %v934
      %v936 = vpop.f32.mrb[0].mxu0
      %v937 = vpop.f32.mrb[0].mxu0
      %v938 = vadd.f32 %v793, %v937
      %v939 = vpop.f32.mrb[0].mxu0
      %940 = vmatprep.mubr.bf16.mxu0 0
      %941 = vmatmul.mubr.bf16.gmra.mrb[0].mxu0 %v589
      %v942 = vpop.f32.mrb[0].mxu0
      %v943 = vadd.f32 %v798, %v942
      %v944 = vpop.f32.mrb[0].mxu0
      %v945 = vpop.f32.mrb[0].mxu0
      %v946 = vadd.f32 %v801, %v945
      %v947 = vpop.f32.mrb[0].mxu0
      %948 = vmatprep.mubr.bf16.mxu0 0
      %949 = vmatmul.mubr.bf16.gmra.mrb[0].mxu0 %v590
      %v950 = vpop.f32.mrb[0].mxu0
      %v951 = vadd.f32 %v806, %v950
      %v952 = vpop.f32.mrb[0].mxu0
      %v953 = vpop.f32.mrb[0].mxu0
      %v954 = vadd.f32 %v809, %v953
      %v955 = vpop.f32.mrb[0].mxu0
      %956 = vmatprep.mubr.bf16.mxu0 0
      %957 = vmatmul.mubr.bf16.gmra.mrb[0].mxu0 %v591
      %v958 = vpop.f32.mrb[0].mxu0
      %v959 = vadd.f32 %v814, %v958
      %v960 = vpop.f32.mrb[0].mxu0
      %v961 = vpop.f32.mrb[0].mxu0
      %v962 = vadd.f32 %v817, %v961
      %v963 = vpop.f32.mrb[0].mxu0
      %964 = vmatprep.mubr.bf16.mxu0 0
      %965 = vmatmul.mubr.bf16.gmra.mrb[0].mxu0 %v592
      %v966 = vpop.f32.mrb[0].mxu0
      %v967 = vadd.f32 %v822, %v966
      %v968 = vpop.f32.mrb[0].mxu0
      %v969 = vpop.f32.mrb[0].mxu0
      %v970 = vadd.f32 %v825, %v969
      %v971 = vpop.f32.mrb[0].mxu0
      %972 = vmatprep.mubr.bf16.mxu0 0
      %973 = vmatmul.mubr.bf16.gmra.mrb[0].mxu0 %v593
      %v974 = vpop.f32.mrb[0].mxu0
      %v975 = vadd.f32 %v830, %v974
      %v976 = vpop.f32.mrb[0].mxu0
      %v977 = vpop.f32.mrb[0].mxu0
      %v978 = vadd.f32 %v833, %v977
      %v979 = vpop.f32.mrb[0].mxu0
      %980 = vdwg.mxu0
      %v981 = vld [vmem:[%s5] sm:$0x1]
      %v982 = vlaneseq
      %v983 = vshrl.u32 %v982, 7
      %v984 = vsub.s32 0, %v983
      %v985 = vrot.slane %v981, %v984
      %v986 = vadd.f32 %v919, %v985
      %v987 = vadd.f32 %v922, %v985
      %v988 = vadd.f32 %v927, %v985
      %v989 = vadd.f32 %v930, %v985
      %v990 = vadd.f32 %v935, %v985
      %v991 = vadd.f32 %v938, %v985
      %v992 = vadd.f32 %v943, %v985
      %v993 = vadd.f32 %v946, %v985
      %v994 = vadd.f32 %v951, %v985
      %v995 = vadd.f32 %v954, %v985
      %v996 = vadd.f32 %v959, %v985
      %v997 = vadd.f32 %v962, %v985
      %v998 = vadd.f32 %v967, %v985
      %v999 = vadd.f32 %v970, %v985
      %v1000 = vadd.f32 %v975, %v985
      %v1001 = vadd.f32 %v978, %v985
      %v1002 = vmax.f32 %v986, 0.0
      %v1003 = vmax.f32 %v987, 0.0
      %v1004 = vmax.f32 %v988, 0.0
      %v1005 = vmax.f32 %v989, 0.0
      %v1006 = vmax.f32 %v990, 0.0
      %v1007 = vmax.f32 %v991, 0.0
      %v1008 = vmax.f32 %v992, 0.0
      %v1009 = vmax.f32 %v993, 0.0
      %v1010 = vmax.f32 %v994, 0.0
      %v1011 = vmax.f32 %v995, 0.0
      %v1012 = vmax.f32 %v996, 0.0
      %v1013 = vmax.f32 %v997, 0.0
      %v1014 = vmax.f32 %v998, 0.0
      %v1015 = vmax.f32 %v999, 0.0
      %v1016 = vmax.f32 %v1000, 0.0
      %v1017 = vmax.f32 %v1001, 0.0
      %v1018 = vld [vmem:[%s5 + $0x1] sm:$0x1]
      %v1019 = vlaneseq
      %v1020 = vshrl.u32 %v1019, 7
      %v1021 = vsub.s32 0, %v1020
      %v1022 = vrot.slane %v1018, %v1021
      %v1023 = vmul.f32 %v1002, %v1022
      %v1024 = vmul.f32 %v1003, %v1022
      %v1025 = vmul.f32 %v1004, %v1022
      %v1026 = vmul.f32 %v1005, %v1022
      %v1027 = vmul.f32 %v1006, %v1022
      %v1028 = vmul.f32 %v1007, %v1022
      %v1029 = vmul.f32 %v1008, %v1022
      %v1030 = vmul.f32 %v1009, %v1022
      %v1031 = vmul.f32 %v1010, %v1022
      %v1032 = vmul.f32 %v1011, %v1022
      %v1033 = vmul.f32 %v1012, %v1022
      %v1034 = vmul.f32 %v1013, %v1022
      %v1035 = vmul.f32 %v1014, %v1022
      %v1036 = vmul.f32 %v1015, %v1022
      %v1037 = vmul.f32 %v1016, %v1022
      %v1038 = vmul.f32 %v1017, %v1022
      %v1039 = vld [vmem:[%s5 + $0x2] sm:$0x1]
      %v1040 = vlaneseq
      %v1041 = vshrl.u32 %v1040, 7
      %v1042 = vsub.s32 0, %v1041
      %v1043 = vrot.slane %v1039, %v1042
      %v1044 = vadd.f32 %v1023, %v1043
      %v1045 = vadd.f32 %v1024, %v1043
      %v1046 = vadd.f32 %v1025, %v1043
      %v1047 = vadd.f32 %v1026, %v1043
      %v1048 = vadd.f32 %v1027, %v1043
      %v1049 = vadd.f32 %v1028, %v1043
      %v1050 = vadd.f32 %v1029, %v1043
      %v1051 = vadd.f32 %v1030, %v1043
      %v1052 = vadd.f32 %v1031, %v1043
      %v1053 = vadd.f32 %v1032, %v1043
      %v1054 = vadd.f32 %v1033, %v1043
      %v1055 = vadd.f32 %v1034, %v1043
      %v1056 = vadd.f32 %v1035, %v1043
      %v1057 = vadd.f32 %v1036, %v1043
      %v1058 = vadd.f32 %v1037, %v1043
      %v1059 = vadd.f32 %v1038, %v1043
      %v1060 = vpack.c.bf16 %v1045, %v1044
      %v1061 = vpack.c.bf16 %v1047, %v1046
      %v1062 = vpack.c.bf16 %v1049, %v1048
      %v1063 = vpack.c.bf16 %v1051, %v1050
      %v1064 = vpack.c.bf16 %v1053, %v1052
      %v1065 = vpack.c.bf16 %v1055, %v1054
      %v1066 = vpack.c.bf16 %v1057, %v1056
      %v1067 = vpack.c.bf16 %v1059, %v1058
      %v1076 = vunpack.c.l.b16 %v1060
      %v1077 = vunpack.c.h.b16 %v1060
      %v1078 = vunpack.c.l.b16 %v1061
      %v1079 = vunpack.c.h.b16 %v1061
      %v1080 = vunpack.c.l.b16 %v1062
      %v1081 = vunpack.c.h.b16 %v1062
      %v1082 = vunpack.c.l.b16 %v1063
      %v1083 = vunpack.c.h.b16 %v1063
      %v1084 = vunpack.c.l.b16 %v1064
      %v1085 = vunpack.c.h.b16 %v1064
      %v1086 = vunpack.c.l.b16 %v1065
      %v1087 = vunpack.c.h.b16 %v1065
      %v1088 = vunpack.c.l.b16 %v1066
      %v1089 = vunpack.c.h.b16 %v1066
      %v1090 = vunpack.c.l.b16 %v1067
      %v1091 = vunpack.c.h.b16 %v1067
      %v1092 = vpack.c.b16 %v1076, %v1076
      %v1093 = vpack.c.b16 %v1077, %v1077
      %v1094 = vpack.c.b16 %v1078, %v1078
      %v1095 = vpack.c.b16 %v1079, %v1079
      %v1096 = vpack.c.b16 %v1080, %v1080
      %v1097 = vpack.c.b16 %v1081, %v1081
      %v1098 = vpack.c.b16 %v1082, %v1082
      %v1099 = vpack.c.b16 %v1083, %v1083
      %v1100 = vpack.c.b16 %v1084, %v1084
      %v1101 = vpack.c.b16 %v1085, %v1085
      %v1102 = vpack.c.b16 %v1086, %v1086
      %v1103 = vpack.c.b16 %v1087, %v1087
      %v1104 = vpack.c.b16 %v1088, %v1088
      %v1105 = vpack.c.b16 %v1089, %v1089
      %v1106 = vpack.c.b16 %v1090, %v1090
      %v1107 = vpack.c.b16 %v1091, %v1091
      %1124 = vst [vmem:[#allocation9] sm:$0xf] %v1092
      %1125 = vst [vmem:[#allocation9 + $0x4] sm:$0xf] %v1093
      %1126 = vst [vmem:[#allocation9 + $0x8] sm:$0xf] %v1094
      %1127 = vst [vmem:[#allocation9 + $0xc] sm:$0xf] %v1095
      %1128 = vst [vmem:[#allocation9 + $0x10] sm:$0xf] %v1096
      %1129 = vst [vmem:[#allocation9 + $0x14] sm:$0xf] %v1097
      %1130 = vst [vmem:[#allocation9 + $0x18] sm:$0xf] %v1098
      %1131 = vst [vmem:[#allocation9 + $0x1c] sm:$0xf] %v1099
      %1132 = vst [vmem:[#allocation9 + $0x20] sm:$0xf] %v1100
      %1133 = vst [vmem:[#allocation9 + $0x24] sm:$0xf] %v1101
      %1134 = vst [vmem:[#allocation9 + $0x28] sm:$0xf] %v1102
      %1135 = vst [vmem:[#allocation9 + $0x2c] sm:$0xf] %v1103
      %1136 = vst [vmem:[#allocation9 + $0x30] sm:$0xf] %v1104
      %1137 = vst [vmem:[#allocation9 + $0x34] sm:$0xf] %v1105
      %1138 = vst [vmem:[#allocation9 + $0x38] sm:$0xf] %v1106
      %1139 = vst [vmem:[#allocation9 + $0x3c] sm:$0xf] %v1107
    $region45: #{tpu_custom_call.1} parent=1 // pred_fallthru
      _
    // Predicated region
    $region46: #{tpu_custom_call.1} parent=1 // pred_check
      _
    $region47: #{tpu_custom_call.1} parent=1 // pred_check_branch
      %1141 = sbr.rel (0) target = $region49
    $region48: #{tpu_custom_call.1} parent=1 // pred_region
      %s1143 = ssub.s32 1024, 1024
      %1144 = vsyncadd [#allocation5], %s1143
      %s1145 = sshll.u32 [#allocation9], 4
      %s1146 = int_to_ptr.vmem [resolvable:$true] %s1145
      %1151 = dma.vmem_to_hbm [thread:$0]  %s1146, 1024, %s6, [#allocation5], 64, 64, 4
    $region49: #{tpu_custom_call.1} parent=1 // pred_fallthru
      _
    // Predicated region
    $region50: #{tpu_custom_call.1} parent=1 // pred_check
      _
    $region51: #{tpu_custom_call.1} parent=1 // pred_check_branch
      %1153 = sbr.rel (0) target = $region53
    $region52: #{tpu_custom_call.1} parent=1 // pred_region
      %1154 = dma.done [#allocation5], 1024
    $region53: #{tpu_custom_call.1} parent=1 // pred_fallthru
      _
    %1155 = vsyncpa [#allocation4], 1
    %1156 = vsyncpa [#allocation7], 1
    %1157 = vsyncpa [#allocation5], 1

</llo_original>
